<compile_context>
chip_gen: v5e
topology: v5e:2x2
jax: 0.10.0
libtpu: 0.0.40
codegen_flags: <defaults>
</compile_context>

<pallas_src>
import jax
import jax.numpy as jnp
from jax.experimental import pallas as pl
from jax.experimental.pallas import tpu as pltpu

HIDDEN = 100
OUT = 1
_LANE = 128      # vreg lane width
_SUBLANE = 8     # vreg sublane width


def _round_up(n, m):
    return (n + m - 1) // m * m


def mlp_kernel(x_ref, w1_ref, b1_ref, w2_ref, b2_ref, o_ref):
    """One batch tile: sigmoid(relu(x @ w1 + b1) @ w2 + b2)."""
    # fc1 on the MXU: bf16 inputs (a no-op cast when the caller already passes
    # bf16 activations), f32 accumulation via preferred_element_type.
    h = jnp.dot(x_ref[...].astype(jnp.bfloat16), w1_ref[...],
                preferred_element_type=jnp.float32)
    # Hidden dim is zero-padded to 128 at param-pack time -> full-vreg, unmasked
    # bias add + relu (no partial-lane masking).
    h = jnp.maximum(h + b1_ref[...], 0.0)                       # (TB, 128) f32
    # fc2 with OUT == 1: a 1-column matmul would push a nearly empty tile through
    # the MXU (full push/drain for 1/128 useful lanes). Do it as a VPU multiply +
    # XLU lane reduction instead -- both slots are idle while fc1 owns the MXU.
    z = jnp.sum(h * w2_ref[...], axis=-1, keepdims=True)        # (TB, 1) f32
    z = z + b2_ref[0, 0]                                        # scalar bias from SMEM
    # Exact sigmoid epilogue (EUP exp + exact f32 divide).  The approximate EUP
    # reciprocal saved nothing in this memory-bound kernel and its ~1e-3 error
    # can flip labels for inputs near the 0.5 decision threshold.
    o_ref[...] = (1.0 / (1.0 + jnp.exp(-z))).astype(o_ref.dtype)


def pack_params(w1, b1, w2, b2):
    """One-time parameter prep (call at param-load time, NOT per forward call).

    Casts w1 to bf16 and zero-pads the hidden dim H -> 128 so the kernel sees an
    aligned K / lane-dense layout; biases and w2 stay f32.  Hoisting this out of
    the jitted forward removes the per-call weight re-read/re-write and the extra
    XLA ops from the critical path.
    """
    D, H = w1.shape
    assert w2.shape == (H, OUT) and OUT == 1, "fc2 reduction assumes a single output unit"
    hp = _round_up(H, _LANE)
    w1p = jnp.zeros((D, hp), jnp.bfloat16).at[:, :H].set(w1.astype(jnp.bfloat16))
    b1p = jnp.zeros((1, hp), jnp.float32).at[:, :H].set(
        jnp.reshape(b1, (1, H)).astype(jnp.float32))
    w2p = jnp.zeros((1, hp), jnp.float32).at[:, :H].set(
        jnp.reshape(w2, (1, H)).astype(jnp.float32))
    b2p = jnp.reshape(b2, (1, 1)).astype(jnp.float32)
    return w1p, b1p, w2p, b2p


def _choose_block_b(B, D, x_itemsize, hp):
    """Pick the batch tile so each grid step moves a few MiB of x from HBM.

    Budgeted against v5e's 16 MiB scoped-VMEM *default* (the most restrictive
    default across v5e/v6e/v7x), assuming double-buffered x tiles plus
    (conservatively) double-buffered resident weights -- no vmem_limit_bytes
    override needed on any generation, while each step still moves ~1-4 MiB of
    HBM to amortize the ~0.35 us fixed per-grid-step cost.
    """
    resident = 2 * (D * hp * 2 + 2 * hp * 4)            # w1 bf16 + b1/w2 f32, x2 buffers
    budget = (13 << 20) - resident                      # ~3 MiB headroom below 16 MiB
    per_buf = max(1 << 20, min(4 << 20, budget // 2))   # per x buffer (double-buffered)
    tb = per_buf // (D * x_itemsize)
    tb = max(_SUBLANE, (tb // _SUBLANE) * _SUBLANE)
    tb = min(tb, 4096)
    # v7x: if the whole batch would fit in one tile but is still "large", split it
    # in two so the "parallel" grid axis feeds both TensorCores (free on v5e/v6e).
    if tb >= B and B * D * x_itemsize >= (4 << 20):
        tb = _round_up(pl.cdiv(B, 2), _SUBLANE)
    if tb >= B:
        tb = B                                          # single full-batch tile, no padding
    return tb


@jax.jit
def mlp_classifier_forward(x, w1p, b1p, w2p, b2p):
    """Fused MLP forward: sigmoid(relu(x @ w1 + b1) @ w2 + b2).

    x: (B, D).  f32 accepted; pass bf16 activations if the producer has them --
       that halves the only large HBM stream and makes the in-kernel cast a no-op
       (do NOT pre-cast in a wrapper: that is a separate un-hidden XLA pass).
    w1p/b1p/w2p/b2p: pre-packed params from pack_params() (one-time prep).

    Batch is tiled with a 1-D grid so large B gets automatic double-buffered
    HBM<->VMEM pipelining (and shards across both TensorCores on v7x); weights
    stay resident in VMEM across grid steps (constant index_map).  The grid uses
    ceiling division -- no whole-array jnp.pad copy of x.  A ragged last tile is
    read padded and its out-of-bounds rows are dropped on store, so padded rows
    never alias real output.
    """
    B, D = x.shape
    hp = w1p.shape[1]
    x_itemsize = jnp.dtype(x.dtype).itemsize
    tb = _choose_block_b(B, D, x_itemsize, hp)
    steps = pl.cdiv(B, tb)

    # Advisory cost hint for XLA scheduling around the custom call.
    cost = pl.CostEstimate(
        flops=2 * B * D * hp + 2 * B * hp,
        transcendentals=B,                               # one exp per row
        bytes_accessed=B * D * x_itemsize + D * hp * 2 + 2 * hp * 4 + B * 4,
    )

    # Output stays (B, 1): with OUT=1 the output HBM traffic is <= 1/D of the x
    # traffic, so the masked (TB,1) store is off the critical path; a lane-dense
    # (1,B) layout would need an in-kernel (TB,1)->(1,TB) relayout of similar cost.
    out = pl.pallas_call(
        mlp_kernel,
        out_shape=jax.ShapeDtypeStruct((B, OUT), jnp.float32),
        grid=(steps,),
        in_specs=[
            pl.BlockSpec((tb, D), lambda i: (i, 0)),      # x: pipelined over batch
            pl.BlockSpec((D, hp), lambda i: (0, 0)),      # w1 (bf16): resident
            pl.BlockSpec((1, hp), lambda i: (0, 0)),      # b1: resident
            pl.BlockSpec((1, hp), lambda i: (0, 0)),      # w2 as a row: resident
            pl.BlockSpec(memory_space=pltpu.SMEM),        # b2: (1,1) scalar in SMEM
        ],
        out_specs=pl.BlockSpec((tb, OUT), lambda i: (i, 0)),
        compiler_params=pltpu.CompilerParams(
            dimension_semantics=("parallel",),            # megacore sharding on v7x
        ),
        cost_estimate=cost,
        # Tiles are sized to >= ~1-4 MiB of HBM per step, so default double
        # buffering already hides DMA latency; pipeline_mode=pl.Buffered(3) on the
        # x spec would only matter if tiles were forced latency-sized.
    )(x, w1p, b1p, w2p, b2p)
    return out


def init_params(key, input_size, hidden_size, output_size):
    """Deterministic init mimicking nn.Linear's U(-1/sqrt(fan_in), 1/sqrt(fan_in))."""
    k1, k2, k3, k4 = jax.random.split(key, 4)
    bound1 = 1.0 / jnp.sqrt(input_size)
    bound2 = 1.0 / jnp.sqrt(hidden_size)
    w1 = jax.random.uniform(k1, (input_size, hidden_size), jnp.float32, -bound1, bound1)
    b1 = jax.random.uniform(k2, (1, hidden_size), jnp.float32, -bound1, bound1)
    w2 = jax.random.uniform(k3, (hidden_size, output_size), jnp.float32, -bound2, bound2)
    b2 = jax.random.uniform(k4, (1, output_size), jnp.float32, -bound2, bound2)
    return w1, b1, w2, b2


if __name__ == "__main__":
    key = jax.random.PRNGKey(0)
    k_x, k_p = jax.random.split(key)

    B, D = 8, 32                      # batch=8, input features=32
    x = jax.random.normal(k_x, (B, D), dtype=jnp.float32)
    w1, b1, w2, b2 = init_params(k_p, D, HIDDEN, OUT)

    packed = pack_params(w1, b1, w2, b2)      # one-time prep, outside the forward
    out = mlp_classifier_forward(x, *packed)
    out = jax.block_until_ready(out)
    assert out.shape == (B, OUT)

    # Reference 1: mirrors the kernel's only intentional relaxation (bf16 MXU
    # inputs with f32 accumulation); fc2 done as an exact f32 elementwise reduce
    # so no default-precision matmul rounding sneaks into the reference.
    h_ref = jnp.maximum(
        jnp.dot(x.astype(jnp.bfloat16), w1.astype(jnp.bfloat16),
                preferred_element_type=jnp.float32) + b1, 0.0)
    z_ref = jnp.sum(h_ref * jnp.reshape(w2, (1, HIDDEN)), axis=-1, keepdims=True) + b2
    ref_bf16 = jax.nn.sigmoid(z_ref)
    assert jnp.allclose(out, ref_bf16, atol=1e-4), float(jnp.max(jnp.abs(out - ref_bf16)))

    # Reference 2: plain f32 module semantics -> loose tolerance (bf16 MXU inputs
    # are the deliberate perf relaxation).
    ref_f32 = jax.nn.sigmoid(jnp.maximum(x @ w1 + b1, 0.0) @ w2 + b2)
    assert jnp.allclose(out, ref_f32, atol=3e-2), float(jnp.max(jnp.abs(out - ref_f32)))

    print("KERNEL_OK")
</pallas_src>

<mosaic_0001>
module attributes {stable_mosaic.version = 11 : i64} {
  func.func @mlp_kernel(%arg0: i32, %arg1: memref<8x32xf32, #tpu.memory_space<vmem>>, %arg2: memref<32x128xbf16, #tpu.memory_space<vmem>>, %arg3: memref<1x128xf32, #tpu.memory_space<vmem>>, %arg4: memref<1x128xf32, #tpu.memory_space<vmem>>, %arg5: memref<1x1xf32, #tpu.memory_space<smem>>, %arg6: memref<8x1xf32, #tpu.memory_space<vmem>>) attributes {dimension_semantics = [#tpu.dimension_semantics<parallel>], iteration_bounds = array<i64: 1>, scalar_prefetch = 0 : i64, scratch_operands = 0 : i64, tpu.core_type = #tpu.core_type<tc>, window_params = [{transform_indices = @transform_0, window_bounds = array<i64: 8, 32>}, {pipeline_mode = #tpu.pipeline_mode<synchronous>, transform_indices = @transform_1, window_bounds = array<i64: 32, 128>}, {pipeline_mode = #tpu.pipeline_mode<synchronous>, transform_indices = @transform_2, window_bounds = array<i64: 1, 128>}, {pipeline_mode = #tpu.pipeline_mode<synchronous>, transform_indices = @transform_3, window_bounds = array<i64: 1, 128>}, {transform_indices = @transform_4, window_bounds = array<i64: 1, 1>}, {transform_indices = @transform_5, window_bounds = array<i64: 8, 1>}]} {
    %c0 = arith.constant 0 : index
    %c0_0 = arith.constant 0 : index
    %0 = vector.load %arg1[%c0, %c0_0] : memref<8x32xf32, #tpu.memory_space<vmem>>, vector<8x32xf32>
    %1 = arith.truncf %0 : vector<8x32xf32> to vector<8x32xbf16>
    %c0_1 = arith.constant 0 : index
    %c0_2 = arith.constant 0 : index
    %2 = vector.load %arg2[%c0_1, %c0_2] : memref<32x128xbf16, #tpu.memory_space<vmem>>, vector<32x128xbf16>
    %cst = arith.constant dense<0.000000e+00> : vector<8x128xf32>
    %3 = tpu.matmul %1, %2, %cst {dimension_numbers = #tpu.dot_dimension_numbers<[1], [0], [0], [1], [0, 0, 1, 1], [], []>} : vector<8x32xbf16>, vector<32x128xbf16>, vector<8x128xf32> -> vector<8x128xf32>
    %c0_3 = arith.constant 0 : index
    %c0_4 = arith.constant 0 : index
    %4 = vector.load %arg3[%c0_3, %c0_4] : memref<1x128xf32, #tpu.memory_space<vmem>>, vector<1x128xf32>
    %5 = vector.broadcast %4 : vector<1x128xf32> to vector<8x128xf32>
    %6 = arith.addf %3, %5 : vector<8x128xf32>
    %cst_5 = arith.constant 0.000000e+00 : f32
    %7 = vector.broadcast %cst_5 : f32 to vector<8x128xf32>
    %8 = arith.maximumf %6, %7 : vector<8x128xf32>
    %c0_6 = arith.constant 0 : index
    %c0_7 = arith.constant 0 : index
    %9 = vector.load %arg4[%c0_6, %c0_7] : memref<1x128xf32, #tpu.memory_space<vmem>>, vector<1x128xf32>
    %10 = vector.broadcast %9 : vector<1x128xf32> to vector<8x128xf32>
    %11 = arith.mulf %8, %10 : vector<8x128xf32>
    %cst_8 = arith.constant dense<0.000000e+00> : vector<8xf32>
    %12 = vector.multi_reduction <add>, %11, %cst_8 [1] : vector<8x128xf32> to vector<8xf32>
    %13 = vector.shape_cast %12 : vector<8xf32> to vector<8x1xf32>
    %c0_9 = arith.constant 0 : index
    %c0_10 = arith.constant 0 : index
    %14 = memref.load %arg5[%c0_9, %c0_10] : memref<1x1xf32, #tpu.memory_space<smem>>
    %15 = vector.broadcast %14 : f32 to vector<8x1xf32>
    %16 = arith.addf %13, %15 : vector<8x1xf32>
    %cst_11 = arith.constant 0.000000e+00 : f32
    %17 = vector.broadcast %cst_11 : f32 to vector<8x1xf32>
    %18 = arith.subf %17, %16 : vector<8x1xf32>
    %19 = math.exp %18 : vector<8x1xf32>
    %cst_12 = arith.constant 1.000000e+00 : f32
    %20 = vector.broadcast %cst_12 : f32 to vector<8x1xf32>
    %21 = arith.addf %20, %19 : vector<8x1xf32>
    %cst_13 = arith.constant 1.000000e+00 : f32
    %22 = vector.broadcast %cst_13 : f32 to vector<8x1xf32>
    %23 = arith.divf %22, %21 : vector<8x1xf32>
    %c0_14 = arith.constant 0 : index
    %c0_15 = arith.constant 0 : index
    %24 = vector.load %arg6[%c0_14, %c0_15] : memref<8x1xf32, #tpu.memory_space<vmem>>, vector<8x1xf32>
    tpu.vector_store %arg6[%c0_14, %c0_15], %23 {strides = array<i32>} : memref<8x1xf32, #tpu.memory_space<vmem>>, vector<8x1xf32>,
    return
  }
  func.func @transform_0(%arg0: i32) -> (i32, i32) {
    %c0_i32 = arith.constant 0 : i32
    %c0_i32_0 = arith.constant 0 : i32
    return %arg0, %c0_i32 : i32, i32
  }
  func.func @transform_1(%arg0: i32) -> (i32, i32) {
    %c0_i32 = arith.constant 0 : i32
    %c0_i32_0 = arith.constant 0 : i32
    %c0_i32_1 = arith.constant 0 : i32
    return %c0_i32, %c0_i32_0 : i32, i32
  }
  func.func @transform_2(%arg0: i32) -> (i32, i32) {
    %c0_i32 = arith.constant 0 : i32
    %c0_i32_0 = arith.constant 0 : i32
    %c0_i32_1 = arith.constant 0 : i32
    return %c0_i32, %c0_i32_0 : i32, i32
  }
  func.func @transform_3(%arg0: i32) -> (i32, i32) {
    %c0_i32 = arith.constant 0 : i32
    %c0_i32_0 = arith.constant 0 : i32
    %c0_i32_1 = arith.constant 0 : i32
    return %c0_i32, %c0_i32_0 : i32, i32
  }
  func.func @transform_4(%arg0: i32) -> (i32, i32) {
    %c0_i32 = arith.constant 0 : i32
    %c0_i32_0 = arith.constant 0 : i32
    %c0_i32_1 = arith.constant 0 : i32
    return %c0_i32, %c0_i32_0 : i32, i32
  }
  func.func @transform_5(%arg0: i32) -> (i32, i32) {
    %c0_i32 = arith.constant 0 : i32
    %c0_i32_0 = arith.constant 0 : i32
    return %arg0, %c0_i32 : i32, i32
  }
}

</mosaic_0001>

<llo_original>
// kernel: mlp_classifier_forward.1
$region0: #{mlp_classifier_forward.1}
  #allocation0 [shape = 'u32[]', space=smem, size = 0x4, offset = 0x4, fixed_abs, tag = 'smem constant byte address 0x4 - core index']
  #allocation1 [shape = 'u32[72,128]{1,0:T(1,128)}', space=vmem, size = 0x9000, scoped, tag = 'internal scratch']
  #allocation2 [shape = 'f32[1,1]{1,0:T(1,128)S(6)}', space=smem, size = 0x200, scoped, tag = 'scoped memory for mlp_classifier_forward.1']
  %s0 = inlined_call_operand.hbm [shape: f32[8,32], index: 0, kind: input, shape index: {}]
  %s1 = inlined_call_operand.hbm [shape: bf16[32,128], index: 1, kind: input, shape index: {}]
  %s2 = inlined_call_operand.vmem [shape: f32[1,128], index: 2, kind: input, shape index: {}]
  %s3 = inlined_call_operand.vmem [shape: f32[1,128], index: 3, kind: input, shape index: {}]
  %s4 = inlined_call_operand.<no memory space> [shape: f32[1,1], index: 4, kind: input, shape index: {}]
  %s5 = inlined_call_operand.vmem [shape: f32[8,1], index: 5, kind: output, shape index: {}]
  %s6 = sld [smem:[#allocation0]]
  $region38: #{mlp_classifier_forward.1} parent=0
    _
  %s8 = ssub.s32 1, %s6
  %s9 = scalar_select 0, %s8, %s6
  %10 = sst [smem:[#allocation2]] %s4
  $region1: #{mlp_classifier_forward.1} parent=0
    #allocation3 [shape = 'u8[4096]{0}', space=vmem, size = 0x1000, scoped, tag = 'input window, operand 0, single buffered']
    #allocation4 [shape = 's32[1]{0}', space=sflag, size = 0x4, scoped, tag = 'scoped memory for mlp_classifier_forward.1']
    #allocation5 [shape = 'u8[8192]{0}', space=vmem, size = 0x2000, scoped, tag = 'input window, operand 1, single buffered']
    #allocation6 [shape = 's32[1]{0}', space=sflag, size = 0x4, scoped, tag = 'scoped memory for mlp_classifier_forward.1']
    %11 = vsyncpa [#allocation4], 0
    %12 = vsyncpa [#allocation6], 0
    // Predicated region
    $region2: #{mlp_classifier_forward.1} parent=1 // pred_check
      _
    $region3: #{mlp_classifier_forward.1} parent=1 // pred_check_branch
      %14 = sbr.rel (0) target = $region5
    $region4: #{mlp_classifier_forward.1} parent=1 // pred_region
      %16 = vsyncadd [#allocation4], 0
      %s18 = sshll.u32 %s0, 4
      %s19 = int_to_ptr.hbm [resolvable:$true] %s18
      %s20 = sshll.u32 [#allocation3], 4
      %s21 = int_to_ptr.vmem [resolvable:$true] %s20
      %23 = dma.hbm_to_vmem [thread:$0]  %s19, 128, %s21, [#allocation4]
    $region5: #{mlp_classifier_forward.1} parent=1 // pred_fallthru
      _
    // Predicated region
    $region6: #{mlp_classifier_forward.1} parent=1 // pred_check
      _
    $region7: #{mlp_classifier_forward.1} parent=1 // pred_check_branch
      %25 = sbr.rel (0) target = $region9
    $region8: #{mlp_classifier_forward.1} parent=1 // pred_region
      %27 = vsyncadd [#allocation6], 0
      %s28 = sshll.u32 %s1, 4
      %s29 = int_to_ptr.hbm [resolvable:$true] %s28
      %s30 = sshll.u32 [#allocation5], 4
      %s31 = int_to_ptr.vmem [resolvable:$true] %s30
      %36 = dma.hbm_to_vmem [thread:$0]  %s29, 256, %s31, [#allocation6], 64, 64, 4
    $region9: #{mlp_classifier_forward.1} parent=1 // pred_fallthru
      _
    // Predicated region
    $region10: #{mlp_classifier_forward.1} parent=1 // pred_check
      _
    $region11: #{mlp_classifier_forward.1} parent=1 // pred_check_branch
      %38 = sbr.rel (0) target = $region13
    $region12: #{mlp_classifier_forward.1} parent=1 // pred_region
      _
    $region13: #{mlp_classifier_forward.1} parent=1 // pred_fallthru
      _
    // Predicated region
    $region14: #{mlp_classifier_forward.1} parent=1 // pred_check
      _
    $region15: #{mlp_classifier_forward.1} parent=1 // pred_check_branch
      %40 = sbr.rel (0) target = $region17
    $region16: #{mlp_classifier_forward.1} parent=1 // pred_region
      _
    $region17: #{mlp_classifier_forward.1} parent=1 // pred_fallthru
      _
    // Predicated region
    $region18: #{mlp_classifier_forward.1} parent=1 // pred_check
      _
    $region19: #{mlp_classifier_forward.1} parent=1 // pred_check_branch
      %42 = sbr.rel (0) target = $region21
    $region20: #{mlp_classifier_forward.1} parent=1 // pred_region
      _
    $region21: #{mlp_classifier_forward.1} parent=1 // pred_fallthru
      _
    // Predicated region
    $region22: #{mlp_classifier_forward.1} parent=1 // pred_check
      _
    $region23: #{mlp_classifier_forward.1} parent=1 // pred_check_branch
      %44 = sbr.rel (0) target = $region25
    $region24: #{mlp_classifier_forward.1} parent=1 // pred_region
      %46 = dma.done [#allocation4], 128
    $region25: #{mlp_classifier_forward.1} parent=1 // pred_fallthru
      _
    // Predicated region
    $region26: #{mlp_classifier_forward.1} parent=1 // pred_check
      _
    $region27: #{mlp_classifier_forward.1} parent=1 // pred_check_branch
      %48 = sbr.rel (0) target = $region29
    $region28: #{mlp_classifier_forward.1} parent=1 // pred_region
      %50 = dma.done [#allocation6], 256
    $region29: #{mlp_classifier_forward.1} parent=1 // pred_fallthru
      _
    %v52 = vld [vmem:[#allocation3] sm:$0xff]
    %v53 = vpack.c.bf16 %v52, %v52
    %v54 = vld [vmem:[#allocation5] sm:$0xf]
    %v55 = vld [vmem:[#allocation5 + $0x4] sm:$0xf]
    %v56 = vld [vmem:[#allocation5 + $0x8] sm:$0xf]
    %v57 = vld [vmem:[#allocation5 + $0xc] sm:$0xf]
    %v58 = vld [vmem:[%s2] sm:$0x1]
    %v60 = vperm.slane %v58, 0
    %v66 = vunpack.c.l.b16 %v54
    %v67 = vunpack.c.l.b16 %v55
    %v68 = vunpack.c.l.b16 %v56
    %v69 = vunpack.c.l.b16 %v57
    %v70 = vpack.c.b16 %v67, %v66
    %v71 = vpack.c.b16 %v69, %v68
    %vm74 = vcmask 261120
    %v76 = vsel %vm74, %v53, 0
    %78 = vmatpush.bf16.msra.mxu0 0
    %79 = vmatpush.bf16.msra.mxu0 0
    %80 = vmatpush.bf16.msra.mxu0 0
    %81 = vmatpush.bf16.msra.mxu0 0
    %82 = vmatpush.bf16.msra.mxu0 0
    %83 = vmatpush.bf16.msra.mxu0 0
    %84 = vmatpush.bf16.msra.mxu0 %v71
    %85 = vmatpush.bf16.msra.mxu0 %v70
    %86 = vmatmul.bf16.gmra.mxu0 %v76
    %v87 = vpop.f32.mrf.mxu0
    %v88 = vadd.f32 %v60, %v87
    %v89 = vpop.f32.mrf.mxu0
    %90 = vdwg.mxu0
    %v91 = vmax.f32 %v88, 0.0
    %v92 = vld [vmem:[%s3] sm:$0x1]
    %v94 = vperm.slane %v92, 0
    %v96 = vmul.f32 %v91, %v94
    %97 = vadd.xlane.f32.xlu0 %v96
    %v98 = vpop.xlane.xlu0 %97
    %s99 = sld [smem:[#allocation2]]
    %v100 = vstv %s99
    %v101 = vadd.f32 %v98, %v100
    %v102 = vsub.f32 0.0, %v101
    %v103 = vmul.f32 %v102, 1.442695
    %v104 = vpow.pop %v103
    %v105 = vadd.f32 %v104, 1.0
    %v106 = vrcp.pop %v105
    %v107 = vmul.f32 %v105, %v106
    %v108 = vsub.f32 1.0, %v107
    %v109 = vmul.f32 %v106, %v108
    %v110 = vadd.f32 %v106, %v109
    %vm111 = vweird.f32 %v105
    %vm112 = vweird.f32 %v106
    %vm113 = vmor %vm111, %vm112
    %v114 = vsel %vm113, %v106, %v110
    %v115 = vand.u32 2147483647, %v105
    %vm116 = vcmp.eq.f32.partialorder %v115, 8.507059e+37
    %v117 = vand.u32 %v105, 2147483648
    %v118 = vor.u32 1.1754944e-38, %v117
    %v119 = vsel %vm116, %v118, %v114
    %v120 = vmul.f32 1.0, %v119
    %vm121 = vcmask 7168
    %122 = vst.msk [vmem:[%s5] sm:$0xff] %vm121, %v120
    // Predicated region
    $region30: #{mlp_classifier_forward.1} parent=1 // pred_check
      _
    $region31: #{mlp_classifier_forward.1} parent=1 // pred_check_branch
      %124 = sbr.rel (0) target = $region33
    $region32: #{mlp_classifier_forward.1} parent=1 // pred_region
      _
    $region33: #{mlp_classifier_forward.1} parent=1 // pred_fallthru
      _
    // Predicated region
    $region34: #{mlp_classifier_forward.1} parent=1 // pred_check
      _
    $region35: #{mlp_classifier_forward.1} parent=1 // pred_check_branch
      %126 = sbr.rel (0) target = $region37
    $region36: #{mlp_classifier_forward.1} parent=1 // pred_region
      _
    $region37: #{mlp_classifier_forward.1} parent=1 // pred_fallthru
      _
    %127 = vsyncpa [#allocation4], 1
    %128 = vsyncpa [#allocation6], 1

</llo_original>
